<compile_context>
chip_gen: v5e
topology: v5e:2x2
jax: 0.10.0
libtpu: 0.0.40
codegen_flags: <defaults>
</compile_context>

<pallas_src>
import functools

import jax
import jax.numpy as jnp
import numpy as np
from jax.experimental import pallas as pl
from jax.experimental.pallas import tpu as pltpu


# ----------------------------------------------------------------------------
# Fused SE kernel: B_TILE batch images per grid step, NCHW layout (C on
# sublanes, flattened H*W on lanes).
#   x_ref   : (B_TILE, C, HW)   input activation block
#   w1t_ref : (C, mid)          fc1 weight, transposed from PyTorch (mid, C)
#   w2_ref  : (C, mid)          fc2 weight, PyTorch layout (C, mid)
#   o_ref   : (B_TILE, C, HW)   gated output block
# ----------------------------------------------------------------------------
def _se_layer_kernel(x_ref, w1t_ref, w2_ref, o_ref, *, inv_hw):
    x = x_ref[...]                                           # (B, C, HW), io dtype
    # Global average pool over the spatial (lane) axis; accumulate in f32.
    pooled = jnp.sum(x.astype(jnp.float32), axis=2, keepdims=True) * inv_hw  # (B, C, 1)
    # fc1 (1x1 conv, no bias): hid[b, m] = sum_c pooled[b, c] * w1[m, c]
    hid = jnp.sum(pooled * w1t_ref[...][None], axis=1, keepdims=True)        # (B, 1, mid)
    hid = jnp.maximum(hid, 0.0)
    # fc2 (1x1 conv, no bias): pre[b, c] = sum_m hid[b, m] * w2[c, m]
    pre = jnp.sum(w2_ref[...][None] * hid, axis=2, keepdims=True)            # (B, C, 1)
    gate = jax.nn.sigmoid(pre)                                               # (B, C, 1) f32
    # Channel-wise gating in the activation dtype (bf16 stays bf16 on v6e/v7x;
    # f32 path unchanged).  Broadcast over the spatial lanes.
    o_ref[...] = (x * gate.astype(x.dtype)).astype(o_ref.dtype)


def _pick_batch_tile(n, per_image_bytes, target_block_bytes=4 << 20, min_grid=2):
    """Largest B_TILE dividing n whose block is ~target size, keeping >=min_grid steps."""
    bt = max(1, int(target_block_bytes // max(per_image_bytes, 1)))
    bt = min(bt, n)
    # Keep at least `min_grid` grid steps when possible (megacore / 2 TCs on v7x).
    while bt > 1 and pl.cdiv(n, bt) < min_grid:
        bt -= 1
    # Avoid partial (masked) blocks: largest divisor of n that is <= bt.
    while n % bt != 0:
        bt -= 1
    return bt


def se_layer_forward(x_nchw, w_fc1, w_fc2):
    """SELayer forward.  x_nchw: (N, C, H, W); w_fc1: (mid, C); w_fc2: (C, mid)."""
    n, c, h, w = x_nchw.shape
    mid = w_fc1.shape[0]
    hw = h * w
    itemsize = jnp.dtype(x_nchw.dtype).itemsize

    x2 = x_nchw.reshape(n, c, hw)          # contiguous merge: no data movement
    w1t = jnp.transpose(w_fc1)             # (C, mid); tiny

    per_image_bytes = c * hw * itemsize
    b_tile = _pick_batch_tile(n, per_image_bytes)
    grid_len = n // b_tile
    block_bytes = b_tile * per_image_bytes

    # VMEM budget: in + out blocks, double-buffered, plus weights and slack.
    # Capped at 64 MiB so the request is valid on v7x; floor of 32 MiB lifts
    # the v5e 16 MiB scoped default for real SE-ResNet shapes.
    weight_bytes = 2 * c * mid * 4
    vmem_need = 2 * 2 * block_bytes + 2 * 2 * weight_bytes + (2 << 20)
    vmem_limit = int(min(64 << 20, max(32 << 20, vmem_need)))

    # Advisory cost estimate: pure bandwidth op (2 passes over x) + tiny MLP.
    cost = pl.CostEstimate(
        flops=int(n * (2 * c * hw + 2 * c * mid)),
        transcendentals=int(n * c),
        bytes_accessed=int(2 * n * c * hw * itemsize + 2 * c * mid * 4),
    )

    out = pl.pallas_call(
        functools.partial(_se_layer_kernel, inv_hw=1.0 / float(hw)),
        out_shape=jax.ShapeDtypeStruct((n, c, hw), x_nchw.dtype),
        grid=(grid_len,),
        in_specs=[
            pl.BlockSpec((b_tile, c, hw), lambda b: (b, 0, 0)),
            pl.BlockSpec((c, mid), lambda b: (0, 0)),
            pl.BlockSpec((c, mid), lambda b: (0, 0)),
        ],
        out_specs=pl.BlockSpec((b_tile, c, hw), lambda b: (b, 0, 0)),
        compiler_params=pltpu.CompilerParams(
            dimension_semantics=("parallel",),
            vmem_limit_bytes=vmem_limit),
        cost_estimate=cost,
    )(x2, w1t, w_fc2)
    return out.reshape(n, c, h, w)


# ----------------------------------------------------------------------------
# Pure-JAX reference (same math, XLA ops) for the correctness check.
# ----------------------------------------------------------------------------
def reference_forward(x_nchw, w_fc1, w_fc2):
    x = x_nchw.astype(jnp.float32)
    pooled = jnp.mean(x, axis=(2, 3))                                   # (N, C)
    hid = jnp.maximum(
        jnp.dot(pooled, w_fc1.T, precision=jax.lax.Precision.HIGHEST), 0.0)
    gate = jax.nn.sigmoid(
        jnp.dot(hid, w_fc2.T, precision=jax.lax.Precision.HIGHEST))     # (N, C)
    return (x * gate[:, :, None, None]).astype(x_nchw.dtype)


if __name__ == "__main__":
    # Small but lane-dense shapes consistent with SE-ResNet: channels a multiple
    # of 128 so channel/spatial blocks tile the (8, 128) vreg cleanly.
    N, C, H, W = 2, 128, 16, 16
    reduction = 16
    mid = C // reduction                    # 8

    key = jax.random.PRNGKey(0)
    kx, k1, k2 = jax.random.split(key, 3)
    x = jax.random.normal(kx, (N, C, H, W), jnp.float32)
    # conv1x1 weights in PyTorch (out_channels, in_channels) layout; torchvision's
    # conv1x1 helper is bias-free, so no bias terms are modeled.
    w_fc1 = jax.random.normal(k1, (mid, C), jnp.float32) / np.sqrt(C)   # fc1
    w_fc2 = jax.random.normal(k2, (C, mid), jnp.float32) / np.sqrt(mid) # fc2

    out = jax.block_until_ready(jax.jit(se_layer_forward)(x, w_fc1, w_fc2))
    ref = jax.block_until_ready(reference_forward(x, w_fc1, w_fc2))

    np.testing.assert_allclose(np.asarray(out), np.asarray(ref),
                               rtol=1e-4, atol=1e-5)
    assert out.shape == (N, C, H, W)
    print("KERNEL_OK")
</pallas_src>

<mosaic_0001>
module attributes {stable_mosaic.version = 11 : i64} {
  func.func @_se_layer_kernel(%arg0: i32, %arg1: memref<1x128x256xf32, #tpu.memory_space<vmem>>, %arg2: memref<128x8xf32, #tpu.memory_space<vmem>>, %arg3: memref<128x8xf32, #tpu.memory_space<vmem>>, %arg4: memref<1x128x256xf32, #tpu.memory_space<vmem>>) attributes {dimension_semantics = [#tpu.dimension_semantics<parallel>], iteration_bounds = array<i64: 2>, scalar_prefetch = 0 : i64, scratch_operands = 0 : i64, tpu.core_type = #tpu.core_type<tc>, window_params = [{transform_indices = @transform_0, window_bounds = array<i64: 1, 128, 256>}, {pipeline_mode = #tpu.pipeline_mode<synchronous>, transform_indices = @transform_1, window_bounds = array<i64: 128, 8>}, {pipeline_mode = #tpu.pipeline_mode<synchronous>, transform_indices = @transform_2, window_bounds = array<i64: 128, 8>}, {transform_indices = @transform_3, window_bounds = array<i64: 1, 128, 256>}]} {
    %c0 = arith.constant 0 : index
    %c0_0 = arith.constant 0 : index
    %c0_1 = arith.constant 0 : index
    %0 = vector.load %arg1[%c0, %c0_0, %c0_1] : memref<1x128x256xf32, #tpu.memory_space<vmem>>, vector<1x128x256xf32>
    %cst = arith.constant dense<0.000000e+00> : vector<1x128xf32>
    %1 = vector.multi_reduction <add>, %0, %cst [2] : vector<1x128x256xf32> to vector<1x128xf32>
    %2 = vector.shape_cast %1 : vector<1x128xf32> to vector<1x128x1xf32>
    %cst_2 = arith.constant 3.906250e-03 : f32
    %3 = vector.broadcast %cst_2 : f32 to vector<1x128x1xf32>
    %4 = arith.mulf %2, %3 : vector<1x128x1xf32>
    %c0_3 = arith.constant 0 : index
    %c0_4 = arith.constant 0 : index
    %5 = vector.load %arg2[%c0_3, %c0_4] : memref<128x8xf32, #tpu.memory_space<vmem>>, vector<128x8xf32>
    %6 = vector.shape_cast %5 : vector<128x8xf32> to vector<1x128x8xf32>
    %7 = vector.broadcast %4 : vector<1x128x1xf32> to vector<1x128x8xf32>
    %8 = arith.mulf %7, %6 : vector<1x128x8xf32>
    %cst_5 = arith.constant dense<0.000000e+00> : vector<1x8xf32>
    %9 = vector.multi_reduction <add>, %8, %cst_5 [1] : vector<1x128x8xf32> to vector<1x8xf32>
    %10 = vector.shape_cast %9 : vector<1x8xf32> to vector<1x1x8xf32>
    %cst_6 = arith.constant 0.000000e+00 : f32
    %11 = vector.broadcast %cst_6 : f32 to vector<1x1x8xf32>
    %12 = arith.maximumf %10, %11 : vector<1x1x8xf32>
    %c0_7 = arith.constant 0 : index
    %c0_8 = arith.constant 0 : index
    %13 = vector.load %arg3[%c0_7, %c0_8] : memref<128x8xf32, #tpu.memory_space<vmem>>, vector<128x8xf32>
    %14 = vector.shape_cast %13 : vector<128x8xf32> to vector<1x128x8xf32>
    %15 = vector.broadcast %12 : vector<1x1x8xf32> to vector<1x128x8xf32>
    %16 = arith.mulf %14, %15 : vector<1x128x8xf32>
    %cst_9 = arith.constant dense<0.000000e+00> : vector<1x128xf32>
    %17 = vector.multi_reduction <add>, %16, %cst_9 [2] : vector<1x128x8xf32> to vector<1x128xf32>
    %18 = vector.shape_cast %17 : vector<1x128xf32> to vector<1x128x1xf32>
    %19 = arith.negf %18 : vector<1x128x1xf32>
    %20 = math.exp %19 : vector<1x128x1xf32>
    %cst_10 = arith.constant 1.000000e+00 : f32
    %21 = vector.broadcast %cst_10 : f32 to vector<1x128x1xf32>
    %22 = arith.addf %21, %20 : vector<1x128x1xf32>
    %23 = arith.divf %21, %22 : vector<1x128x1xf32>
    %24 = vector.broadcast %23 : vector<1x128x1xf32> to vector<1x128x256xf32>
    %25 = arith.mulf %0, %24 : vector<1x128x256xf32>
    %c0_11 = arith.constant 0 : index
    %c0_12 = arith.constant 0 : index
    %c0_13 = arith.constant 0 : index
    %26 = vector.load %arg4[%c0_11, %c0_12, %c0_13] : memref<1x128x256xf32, #tpu.memory_space<vmem>>, vector<1x128x256xf32>
    tpu.vector_store %arg4[%c0_11, %c0_12, %c0_13], %25 {strides = array<i32>} : memref<1x128x256xf32, #tpu.memory_space<vmem>>, vector<1x128x256xf32>,
    return
  }
  func.func @transform_0(%arg0: i32) -> (i32, i32, i32) {
    %c0_i32 = arith.constant 0 : i32
    %c0_i32_0 = arith.constant 0 : i32
    %c0_i32_1 = arith.constant 0 : i32
    return %arg0, %c0_i32, %c0_i32_0 : i32, i32, i32
  }
  func.func @transform_1(%arg0: i32) -> (i32, i32) {
    %c0_i32 = arith.constant 0 : i32
    %c0_i32_0 = arith.constant 0 : i32
    %c0_i32_1 = arith.constant 0 : i32
    return %c0_i32, %c0_i32_0 : i32, i32
  }
  func.func @transform_2(%arg0: i32) -> (i32, i32) {
    %c0_i32 = arith.constant 0 : i32
    %c0_i32_0 = arith.constant 0 : i32
    %c0_i32_1 = arith.constant 0 : i32
    return %c0_i32, %c0_i32_0 : i32, i32
  }
  func.func @transform_3(%arg0: i32) -> (i32, i32, i32) {
    %c0_i32 = arith.constant 0 : i32
    %c0_i32_0 = arith.constant 0 : i32
    %c0_i32_1 = arith.constant 0 : i32
    return %arg0, %c0_i32, %c0_i32_0 : i32, i32, i32
  }
}

</mosaic_0001>

<llo_original>
// kernel: se_layer_forward.1
$region0: #{se_layer_forward.1}
  #allocation0 [shape = 'u32[]', space=smem, size = 0x4, offset = 0x4, fixed_abs, tag = 'smem constant byte address 0x4 - core index']
  #allocation1 [shape = 'u32[72,128]{1,0:T(1,128)}', space=vmem, size = 0x9000, scoped, tag = 'internal scratch']
  %s0 = inlined_call_operand.vmem [shape: f32[2,128,256], index: 0, kind: input, shape index: {}]
  %s1 = inlined_call_operand.vmem [shape: f32[128,8], index: 1, kind: input, shape index: {}]
  %s2 = inlined_call_operand.vmem [shape: f32[128,8], index: 2, kind: input, shape index: {}]
  %s3 = inlined_call_operand.vmem [shape: f32[2,128,256], index: 3, kind: output, shape index: {}]
  %s4 = sld [smem:[#allocation0]]
  $region45: #{se_layer_forward.1} parent=0
    _
  %s6 = ssub.s32 1, %s4
  %s7 = scalar_select 0, %s6, %s4
  loop: start=0, step=1, limit=4
  $region2: #{se_layer_forward.1} parent=0 // loop_pre_header
    _
  $region3: #{se_layer_forward.1} parent=0 // loop_header
    %s9 = sphi 0, %s13
    %p10 = scmp.ge.s32.totalorder %s9, 4
    %s19 = sphi 0, %s21
    %s22 = sphi 0, %s19
    %s23 = sphi 0, %s22
    %s39 = sphi 0, %s23
    %s43 = sphi 0, %s43
    %s45 = sphi 0, %s43
    %s46 = sphi 0, %s45
    %s60 = sphi 0, %s46
    %s64 = sphi 0, %s64
    %s66 = sphi 0, %s64
    %s67 = sphi 0, %s66
    %s81 = sphi 0, %s67
    %s87 = sphi 0, %s89
    %s90 = sphi 0, %s87
    %s91 = sphi 0, %s90
    %s107 = sphi 0, %s91
  $region4: #{se_layer_forward.1} parent=0 // loop_header_branch
    %12 = sbr.rel (%p10) target = $region8
  $region5: #{se_layer_forward.1} parent=0 // loop_body
    %s14 = ssub.s32 %s9, 1
    %s15 = ssub.s32 %s9, 2
    %s16 = sadd.s32 %s9, 1
    %s17 = ssub.s32 %s9, %s16
    %p18 = scmp.eq.s32.totalorder %s17, 0
    %s20 = sadd.s32 %s19, 1
    %s21 = scalar_select %p18, %s19, %s20
    %p24 = pneg %p18
    %p25 = scmp.eq.s32.totalorder %s9, 1
    %p26 = por %p24, %p25
    %p27 = scmp.ne.s32.totalorder %s19, %s22
    %p28 = scmp.eq.s32.totalorder %s9, 0
    %p29 = por %p27, %p28
    %p30 = scmp.ne.s32.totalorder %s19, %s22
    %p31 = scmp.eq.s32.totalorder %s14, 1
    %p32 = por %p30, %p31
    %p33 = scmp.ne.s32.totalorder %s22, %s23
    %p34 = scmp.eq.s32.totalorder %s14, 0
    %p35 = por %p33, %p34
    %p36 = scmp.ne.s32.totalorder %s22, %s23
    %p37 = scmp.eq.s32.totalorder %s15, 1
    %p38 = por %p36, %p37
    %p40 = scmp.ne.s32.totalorder %s23, %s39
    %p41 = scmp.eq.s32.totalorder %s15, 0
    %p42 = por %p40, %p41
    %s44 = sadd.s32 %s43, 1
    %p47 = scmp.eq.s32.totalorder %s9, 1
    %p48 = scmp.ne.s32.totalorder %s43, %s45
    %p49 = scmp.eq.s32.totalorder %s9, 0
    %p50 = por %p48, %p49
    %p51 = scmp.ne.s32.totalorder %s43, %s45
    %p52 = scmp.eq.s32.totalorder %s14, 1
    %p53 = por %p51, %p52
    %p54 = scmp.ne.s32.totalorder %s45, %s46
    %p55 = scmp.eq.s32.totalorder %s14, 0
    %p56 = por %p54, %p55
    %p57 = scmp.ne.s32.totalorder %s45, %s46
    %p58 = scmp.eq.s32.totalorder %s15, 1
    %p59 = por %p57, %p58
    %p61 = scmp.ne.s32.totalorder %s46, %s60
    %p62 = scmp.eq.s32.totalorder %s15, 0
    %p63 = por %p61, %p62
    %s65 = sadd.s32 %s64, 1
    %p68 = scmp.eq.s32.totalorder %s9, 1
    %p69 = scmp.ne.s32.totalorder %s64, %s66
    %p70 = scmp.eq.s32.totalorder %s9, 0
    %p71 = por %p69, %p70
    %p72 = scmp.ne.s32.totalorder %s64, %s66
    %p73 = scmp.eq.s32.totalorder %s14, 1
    %p74 = por %p72, %p73
    %p75 = scmp.ne.s32.totalorder %s66, %s67
    %p76 = scmp.eq.s32.totalorder %s14, 0
    %p77 = por %p75, %p76
    %p78 = scmp.ne.s32.totalorder %s66, %s67
    %p79 = scmp.eq.s32.totalorder %s15, 1
    %p80 = por %p78, %p79
    %p82 = scmp.ne.s32.totalorder %s67, %s81
    %p83 = scmp.eq.s32.totalorder %s15, 0
    %p84 = por %p82, %p83
    %s85 = ssub.s32 %s9, %s16
    %p86 = scmp.eq.s32.totalorder %s85, 0
    %s88 = sadd.s32 %s87, 1
    %s89 = scalar_select %p86, %s87, %s88
    %p92 = pneg %p86
    %p93 = scmp.eq.s32.totalorder %s9, 1
    %p94 = por %p92, %p93
    %p95 = scmp.ne.s32.totalorder %s87, %s90
    %p96 = scmp.eq.s32.totalorder %s9, 0
    %p97 = por %p95, %p96
    %p98 = scmp.ne.s32.totalorder %s87, %s90
    %p99 = scmp.eq.s32.totalorder %s14, 1
    %p100 = por %p98, %p99
    %p101 = scmp.ne.s32.totalorder %s90, %s91
    %p102 = scmp.eq.s32.totalorder %s14, 0
    %p103 = por %p101, %p102
    %p104 = scmp.ne.s32.totalorder %s90, %s91
    %p105 = scmp.eq.s32.totalorder %s15, 1
    %p106 = por %p104, %p105
    %p108 = scmp.ne.s32.totalorder %s91, %s107
    %p109 = scmp.eq.s32.totalorder %s15, 0
    %p110 = por %p108, %p109
    %p111 = scmp.le.s32.totalorder 1, %s9
    %p112 = scmp.lt.s32.totalorder %s9, 3
    %p113 = pnand %p111, %p112
    %p114 = pneg %p113
    // Predicated region
    $region9: #{se_layer_forward.1} parent=5 // pred_check
      _
    $region10: #{se_layer_forward.1} parent=5 // pred_check_branch
      %116 = sbr.rel (%p113) target = $region12
    $region11: #{se_layer_forward.1} parent=5 // pred_region
      %s117 = ssub.s32 %s9, 1
      // Predicated region
      $region13: #{se_layer_forward.1} parent=11 // pred_check
        %p118 = pneg %p56
      $region14: #{se_layer_forward.1} parent=11 // pred_check_branch
        %120 = sbr.rel (%p118) target = $region16
      $region15: #{se_layer_forward.1} parent=11 // pred_region
        _
      $region16: #{se_layer_forward.1} parent=11 // pred_fallthru
        _
      // Predicated region
      $region17: #{se_layer_forward.1} parent=11 // pred_check
        %p121 = pneg %p77
      $region18: #{se_layer_forward.1} parent=11 // pred_check_branch
        %123 = sbr.rel (%p121) target = $region20
      $region19: #{se_layer_forward.1} parent=11 // pred_region
        _
      $region20: #{se_layer_forward.1} parent=11 // pred_fallthru
        _
    $region12: #{se_layer_forward.1} parent=5 // pred_fallthru
      _
    %p124 = scmp.lt.s32.totalorder %s9, 2
    // Predicated region
    $region21: #{se_layer_forward.1} parent=5 // pred_check
      %p125 = pneg %p124
    $region22: #{se_layer_forward.1} parent=5 // pred_check_branch
      %127 = sbr.rel (%p125) target = $region24
    $region23: #{se_layer_forward.1} parent=5 // pred_region
      // Predicated region
      $region25: #{se_layer_forward.1} parent=23 // pred_check
        %p128 = pneg %p29
      $region26: #{se_layer_forward.1} parent=23 // pred_check_branch
        %130 = sbr.rel (%p128) target = $region28
      $region27: #{se_layer_forward.1} parent=23 // pred_region
        %p131 = scmp.lt.s32.totalorder %s9, 1
        %s132 = scalar_select %p131, %s9, 1
        %s133 = smul.addr %s132, 32
        %s134 = smul.addr %s133, 8
        %s135 = scalar_lea.vmem %s0, %s134
      $region28: #{se_layer_forward.1} parent=23 // pred_fallthru
        _
    $region24: #{se_layer_forward.1} parent=5 // pred_fallthru
      _
    %p136 = scmp.le.s32.totalorder 1, %s9
    %p137 = scmp.lt.s32.totalorder %s9, 3
    %p138 = pnand %p136, %p137
    %p139 = pneg %p138
    // Predicated region
    $region29: #{se_layer_forward.1} parent=5 // pred_check
      _
    $region30: #{se_layer_forward.1} parent=5 // pred_check_branch
      %141 = sbr.rel (%p138) target = $region32
    $region31: #{se_layer_forward.1} parent=5 // pred_region
      %s142 = ssub.s32 %s9, 1
      %p143 = scmp.lt.s32.totalorder %s14, 1
      %s144 = scalar_select %p143, %s14, 1
      %s145 = smul.addr %s144, 32
      %s146 = smul.addr %s145, 8
      %s147 = scalar_lea.vmem %s0, %s146
      %p148 = pneg %p35
      %p149 = pneg %p32
      %p150 = pneg %p56
      %p151 = pneg %p53
      %p152 = pneg %p77
      %p153 = pneg %p74
      %p154 = pneg %p103
      %p155 = pneg %p100
      %p156 = scmp.lt.s32.totalorder %s14, 1
      %s157 = scalar_select %p156, %s14, 1
      %s158 = smul.addr %s157, 32
      %s159 = smul.addr %s158, 8
      %s160 = scalar_lea.vmem %s3, %s159
      %p161 = scmp.lt.s32.totalorder %s14, 1
      %s162 = scalar_select %p161, %s14, 1
      %s163 = smul.addr %s162, 32
      %s164 = smul.addr %s163, 8
      %s165 = scalar_lea.vmem %s0, %s164
      %p166 = scmp.lt.s32.totalorder %s14, 1
      %s167 = scalar_select %p166, %s14, 1
      %s168 = smul.addr %s167, 32
      %s169 = smul.addr %s168, 8
      %s170 = scalar_lea.vmem %s3, %s169
      %v171 = vld [vmem:[%s165] sm:$0xff]
      %v172 = vld [vmem:[%s165 + $0x8] sm:$0xff]
      %v173 = vld [vmem:[%s165 + $0x10] sm:$0xff]
      %v174 = vld [vmem:[%s165 + $0x18] sm:$0xff]
      %v175 = vld [vmem:[%s165 + $0x20] sm:$0xff]
      %v176 = vld [vmem:[%s165 + $0x28] sm:$0xff]
      %v177 = vld [vmem:[%s165 + $0x30] sm:$0xff]
      %v178 = vld [vmem:[%s165 + $0x38] sm:$0xff]
      %v179 = vld [vmem:[%s165 + $0x40] sm:$0xff]
      %v180 = vld [vmem:[%s165 + $0x48] sm:$0xff]
      %v181 = vld [vmem:[%s165 + $0x50] sm:$0xff]
      %v182 = vld [vmem:[%s165 + $0x58] sm:$0xff]
      %v183 = vld [vmem:[%s165 + $0x60] sm:$0xff]
      %v184 = vld [vmem:[%s165 + $0x68] sm:$0xff]
      %v185 = vld [vmem:[%s165 + $0x70] sm:$0xff]
      %v186 = vld [vmem:[%s165 + $0x78] sm:$0xff]
      %v187 = vld [vmem:[%s165 + $0x80] sm:$0xff]
      %v188 = vld [vmem:[%s165 + $0x88] sm:$0xff]
      %v189 = vld [vmem:[%s165 + $0x90] sm:$0xff]
      %v190 = vld [vmem:[%s165 + $0x98] sm:$0xff]
      %v191 = vld [vmem:[%s165 + $0xa0] sm:$0xff]
      %v192 = vld [vmem:[%s165 + $0xa8] sm:$0xff]
      %v193 = vld [vmem:[%s165 + $0xb0] sm:$0xff]
      %v194 = vld [vmem:[%s165 + $0xb8] sm:$0xff]
      %v195 = vld [vmem:[%s165 + $0xc0] sm:$0xff]
      %v196 = vld [vmem:[%s165 + $0xc8] sm:$0xff]
      %v197 = vld [vmem:[%s165 + $0xd0] sm:$0xff]
      %v198 = vld [vmem:[%s165 + $0xd8] sm:$0xff]
      %v199 = vld [vmem:[%s165 + $0xe0] sm:$0xff]
      %v200 = vld [vmem:[%s165 + $0xe8] sm:$0xff]
      %v201 = vld [vmem:[%s165 + $0xf0] sm:$0xff]
      %v202 = vld [vmem:[%s165 + $0xf8] sm:$0xff]
      %v203 = vadd.f32 %v171, %v172
      %204 = vadd.xlane.f32.xlu0 %v203
      %v205 = vpop.xlane.xlu0 %204
      %v206 = vadd.f32 %v173, %v174
      %207 = vadd.xlane.f32.xlu0 %v206
      %v208 = vpop.xlane.xlu0 %207
      %v209 = vadd.f32 %v175, %v176
      %210 = vadd.xlane.f32.xlu0 %v209
      %v211 = vpop.xlane.xlu0 %210
      %v212 = vadd.f32 %v177, %v178
      %213 = vadd.xlane.f32.xlu0 %v212
      %v214 = vpop.xlane.xlu0 %213
      %v215 = vadd.f32 %v179, %v180
      %216 = vadd.xlane.f32.xlu0 %v215
      %v217 = vpop.xlane.xlu0 %216
      %v218 = vadd.f32 %v181, %v182
      %219 = vadd.xlane.f32.xlu0 %v218
      %v220 = vpop.xlane.xlu0 %219
      %v221 = vadd.f32 %v183, %v184
      %222 = vadd.xlane.f32.xlu0 %v221
      %v223 = vpop.xlane.xlu0 %222
      %v224 = vadd.f32 %v185, %v186
      %225 = vadd.xlane.f32.xlu0 %v224
      %v226 = vpop.xlane.xlu0 %225
      %v227 = vadd.f32 %v187, %v188
      %228 = vadd.xlane.f32.xlu0 %v227
      %v229 = vpop.xlane.xlu0 %228
      %v230 = vadd.f32 %v189, %v190
      %231 = vadd.xlane.f32.xlu0 %v230
      %v232 = vpop.xlane.xlu0 %231
      %v233 = vadd.f32 %v191, %v192
      %234 = vadd.xlane.f32.xlu0 %v233
      %v235 = vpop.xlane.xlu0 %234
      %v236 = vadd.f32 %v193, %v194
      %237 = vadd.xlane.f32.xlu0 %v236
      %v238 = vpop.xlane.xlu0 %237
      %v239 = vadd.f32 %v195, %v196
      %240 = vadd.xlane.f32.xlu0 %v239
      %v241 = vpop.xlane.xlu0 %240
      %v242 = vadd.f32 %v197, %v198
      %243 = vadd.xlane.f32.xlu0 %v242
      %v244 = vpop.xlane.xlu0 %243
      %v245 = vadd.f32 %v199, %v200
      %246 = vadd.xlane.f32.xlu0 %v245
      %v247 = vpop.xlane.xlu0 %246
      %v248 = vadd.f32 %v201, %v202
      %249 = vadd.xlane.f32.xlu0 %v248
      %v250 = vpop.xlane.xlu0 %249
      %v251 = vmul.f32 %v205, 0.00390625
      %v252 = vmul.f32 %v208, 0.00390625
      %v253 = vmul.f32 %v211, 0.00390625
      %v254 = vmul.f32 %v214, 0.00390625
      %v255 = vmul.f32 %v217, 0.00390625
      %v256 = vmul.f32 %v220, 0.00390625
      %v257 = vmul.f32 %v223, 0.00390625
      %v258 = vmul.f32 %v226, 0.00390625
      %v259 = vmul.f32 %v229, 0.00390625
      %v260 = vmul.f32 %v232, 0.00390625
      %v261 = vmul.f32 %v235, 0.00390625
      %v262 = vmul.f32 %v238, 0.00390625
      %v263 = vmul.f32 %v241, 0.00390625
      %v264 = vmul.f32 %v244, 0.00390625
      %v265 = vmul.f32 %v247, 0.00390625
      %v266 = vmul.f32 %v250, 0.00390625
      %v267 = vld [vmem:[%s1] sm:$0xff]
      %v268 = vld [vmem:[%s1 + $0x8] sm:$0xff]
      %v269 = vld [vmem:[%s1 + $0x10] sm:$0xff]
      %v270 = vld [vmem:[%s1 + $0x18] sm:$0xff]
      %v271 = vld [vmem:[%s1 + $0x20] sm:$0xff]
      %v272 = vld [vmem:[%s1 + $0x28] sm:$0xff]
      %v273 = vld [vmem:[%s1 + $0x30] sm:$0xff]
      %v274 = vld [vmem:[%s1 + $0x38] sm:$0xff]
      %v275 = vld [vmem:[%s1 + $0x40] sm:$0xff]
      %v276 = vld [vmem:[%s1 + $0x48] sm:$0xff]
      %v277 = vld [vmem:[%s1 + $0x50] sm:$0xff]
      %v278 = vld [vmem:[%s1 + $0x58] sm:$0xff]
      %v279 = vld [vmem:[%s1 + $0x60] sm:$0xff]
      %v280 = vld [vmem:[%s1 + $0x68] sm:$0xff]
      %v281 = vld [vmem:[%s1 + $0x70] sm:$0xff]
      %v282 = vld [vmem:[%s1 + $0x78] sm:$0xff]
      %v283 = vmul.f32 %v251, %v267
      %v284 = vmul.f32 %v252, %v268
      %v285 = vmul.f32 %v253, %v269
      %v286 = vmul.f32 %v254, %v270
      %v287 = vmul.f32 %v255, %v271
      %v288 = vmul.f32 %v256, %v272
      %v289 = vmul.f32 %v257, %v273
      %v290 = vmul.f32 %v258, %v274
      %v291 = vmul.f32 %v259, %v275
      %v292 = vmul.f32 %v260, %v276
      %v293 = vmul.f32 %v261, %v277
      %v294 = vmul.f32 %v262, %v278
      %v295 = vmul.f32 %v263, %v279
      %v296 = vmul.f32 %v264, %v280
      %v297 = vmul.f32 %v265, %v281
      %v298 = vmul.f32 %v266, %v282
      %vm299 = vcmask 64512
      %v300 = vsel %vm299, %v283, 0.0
      %v301 = vsel %vm299, %v284, 0.0
      %v302 = vadd.f32 %v300, %v301
      %v303 = vsel %vm299, %v285, 0.0
      %v304 = vadd.f32 %v302, %v303
      %v305 = vsel %vm299, %v286, 0.0
      %v306 = vadd.f32 %v304, %v305
      %v307 = vsel %vm299, %v287, 0.0
      %v308 = vadd.f32 %v306, %v307
      %v309 = vsel %vm299, %v288, 0.0
      %v310 = vadd.f32 %v308, %v309
      %v311 = vsel %vm299, %v289, 0.0
      %v312 = vadd.f32 %v310, %v311
      %v313 = vsel %vm299, %v290, 0.0
      %v314 = vadd.f32 %v312, %v313
      %v315 = vsel %vm299, %v291, 0.0
      %v316 = vadd.f32 %v314, %v315
      %v317 = vsel %vm299, %v292, 0.0
      %v318 = vadd.f32 %v316, %v317
      %v319 = vsel %vm299, %v293, 0.0
      %v320 = vadd.f32 %v318, %v319
      %v321 = vsel %vm299, %v294, 0.0
      %v322 = vadd.f32 %v320, %v321
      %v323 = vsel %vm299, %v295, 0.0
      %v324 = vadd.f32 %v322, %v323
      %v325 = vsel %vm299, %v296, 0.0
      %v326 = vadd.f32 %v324, %v325
      %v327 = vsel %vm299, %v297, 0.0
      %v328 = vadd.f32 %v326, %v327
      %v329 = vsel %vm299, %v298, 0.0
      %v330 = vadd.f32 %v328, %v329
      %v331 = vrot.slane %v330, 4
      %v332 = vadd.f32 %v330, %v331
      %v333 = vrot.slane %v332, 2
      %v334 = vadd.f32 %v332, %v333
      %v335 = vrot.slane %v334, 1
      %v336 = vadd.f32 %v334, %v335
      %v337 = vmax.f32 %v336, 0.0
      %v338 = vld [vmem:[%s2] sm:$0xff]
      %v339 = vld [vmem:[%s2 + $0x8] sm:$0xff]
      %v340 = vld [vmem:[%s2 + $0x10] sm:$0xff]
      %v341 = vld [vmem:[%s2 + $0x18] sm:$0xff]
      %v342 = vld [vmem:[%s2 + $0x20] sm:$0xff]
      %v343 = vld [vmem:[%s2 + $0x28] sm:$0xff]
      %v344 = vld [vmem:[%s2 + $0x30] sm:$0xff]
      %v345 = vld [vmem:[%s2 + $0x38] sm:$0xff]
      %v346 = vld [vmem:[%s2 + $0x40] sm:$0xff]
      %v347 = vld [vmem:[%s2 + $0x48] sm:$0xff]
      %v348 = vld [vmem:[%s2 + $0x50] sm:$0xff]
      %v349 = vld [vmem:[%s2 + $0x58] sm:$0xff]
      %v350 = vld [vmem:[%s2 + $0x60] sm:$0xff]
      %v351 = vld [vmem:[%s2 + $0x68] sm:$0xff]
      %v352 = vld [vmem:[%s2 + $0x70] sm:$0xff]
      %v353 = vld [vmem:[%s2 + $0x78] sm:$0xff]
      %v354 = vmul.f32 %v338, %v337
      %v355 = vmul.f32 %v339, %v337
      %v356 = vmul.f32 %v340, %v337
      %v357 = vmul.f32 %v341, %v337
      %v358 = vmul.f32 %v342, %v337
      %v359 = vmul.f32 %v343, %v337
      %v360 = vmul.f32 %v344, %v337
      %v361 = vmul.f32 %v345, %v337
      %v362 = vmul.f32 %v346, %v337
      %v363 = vmul.f32 %v347, %v337
      %v364 = vmul.f32 %v348, %v337
      %v365 = vmul.f32 %v349, %v337
      %v366 = vmul.f32 %v350, %v337
      %v367 = vmul.f32 %v351, %v337
      %v368 = vmul.f32 %v352, %v337
      %v369 = vmul.f32 %v353, %v337
      %v370 = vsel %vm299, %v354, 0.0
      %371 = vadd.xlane.f32.xlu0 %v370
      %v372 = vpop.xlane.xlu0 %371
      %v373 = vsel %vm299, %v355, 0.0
      %374 = vadd.xlane.f32.xlu0 %v373
      %v375 = vpop.xlane.xlu0 %374
      %v376 = vsel %vm299, %v356, 0.0
      %377 = vadd.xlane.f32.xlu0 %v376
      %v378 = vpop.xlane.xlu0 %377
      %v379 = vsel %vm299, %v357, 0.0
      %380 = vadd.xlane.f32.xlu0 %v379
      %v381 = vpop.xlane.xlu0 %380
      %v382 = vsel %vm299, %v358, 0.0
      %383 = vadd.xlane.f32.xlu0 %v382
      %v384 = vpop.xlane.xlu0 %383
      %v385 = vsel %vm299, %v359, 0.0
      %386 = vadd.xlane.f32.xlu0 %v385
      %v387 = vpop.xlane.xlu0 %386
      %v388 = vsel %vm299, %v360, 0.0
      %389 = vadd.xlane.f32.xlu0 %v388
      %v390 = vpop.xlane.xlu0 %389
      %v391 = vsel %vm299, %v361, 0.0
      %392 = vadd.xlane.f32.xlu0 %v391
      %v393 = vpop.xlane.xlu0 %392
      %v394 = vsel %vm299, %v362, 0.0
      %395 = vadd.xlane.f32.xlu0 %v394
      %v396 = vpop.xlane.xlu0 %395
      %v397 = vsel %vm299, %v363, 0.0
      %398 = vadd.xlane.f32.xlu0 %v397
      %v399 = vpop.xlane.xlu0 %398
      %v400 = vsel %vm299, %v364, 0.0
      %401 = vadd.xlane.f32.xlu0 %v400
      %v402 = vpop.xlane.xlu0 %401
      %v403 = vsel %vm299, %v365, 0.0
      %404 = vadd.xlane.f32.xlu0 %v403
      %v405 = vpop.xlane.xlu0 %404
      %v406 = vsel %vm299, %v366, 0.0
      %407 = vadd.xlane.f32.xlu0 %v406
      %v408 = vpop.xlane.xlu0 %407
      %v409 = vsel %vm299, %v367, 0.0
      %410 = vadd.xlane.f32.xlu0 %v409
      %v411 = vpop.xlane.xlu0 %410
      %v412 = vsel %vm299, %v368, 0.0
      %413 = vadd.xlane.f32.xlu0 %v412
      %v414 = vpop.xlane.xlu0 %413
      %v415 = vsel %vm299, %v369, 0.0
      %416 = vadd.xlane.f32.xlu0 %v415
      %v417 = vpop.xlane.xlu0 %416
      %v418 = vxor.u32 %v372, 2147483648
      %v419 = vxor.u32 %v375, 2147483648
      %v420 = vxor.u32 %v378, 2147483648
      %v421 = vxor.u32 %v381, 2147483648
      %v422 = vxor.u32 %v384, 2147483648
      %v423 = vxor.u32 %v387, 2147483648
      %v424 = vxor.u32 %v390, 2147483648
      %v425 = vxor.u32 %v393, 2147483648
      %v426 = vxor.u32 %v396, 2147483648
      %v427 = vxor.u32 %v399, 2147483648
      %v428 = vxor.u32 %v402, 2147483648
      %v429 = vxor.u32 %v405, 2147483648
      %v430 = vxor.u32 %v408, 2147483648
      %v431 = vxor.u32 %v411, 2147483648
      %v432 = vxor.u32 %v414, 2147483648
      %v433 = vxor.u32 %v417, 2147483648
      %v434 = vmul.f32 %v418, 1.442695
      %v435 = vpow.pop %v434
      %v436 = vmul.f32 %v419, 1.442695
      %v437 = vpow.pop %v436
      %v438 = vmul.f32 %v420, 1.442695
      %v439 = vpow.pop %v438
      %v440 = vmul.f32 %v421, 1.442695
      %v441 = vpow.pop %v440
      %v442 = vmul.f32 %v422, 1.442695
      %v443 = vpow.pop %v442
      %v444 = vmul.f32 %v423, 1.442695
      %v445 = vpow.pop %v444
      %v446 = vmul.f32 %v424, 1.442695
      %v447 = vpow.pop %v446
      %v448 = vmul.f32 %v425, 1.442695
      %v449 = vpow.pop %v448
      %v450 = vmul.f32 %v426, 1.442695
      %v451 = vpow.pop %v450
      %v452 = vmul.f32 %v427, 1.442695
      %v453 = vpow.pop %v452
      %v454 = vmul.f32 %v428, 1.442695
      %v455 = vpow.pop %v454
      %v456 = vmul.f32 %v429, 1.442695
      %v457 = vpow.pop %v456
      %v458 = vmul.f32 %v430, 1.442695
      %v459 = vpow.pop %v458
      %v460 = vmul.f32 %v431, 1.442695
      %v461 = vpow.pop %v460
      %v462 = vmul.f32 %v432, 1.442695
      %v463 = vpow.pop %v462
      %v464 = vmul.f32 %v433, 1.442695
      %v465 = vpow.pop %v464
      %v466 = vadd.f32 %v435, 1.0
      %v467 = vadd.f32 %v437, 1.0
      %v468 = vadd.f32 %v439, 1.0
      %v469 = vadd.f32 %v441, 1.0
      %v470 = vadd.f32 %v443, 1.0
      %v471 = vadd.f32 %v445, 1.0
      %v472 = vadd.f32 %v447, 1.0
      %v473 = vadd.f32 %v449, 1.0
      %v474 = vadd.f32 %v451, 1.0
      %v475 = vadd.f32 %v453, 1.0
      %v476 = vadd.f32 %v455, 1.0
      %v477 = vadd.f32 %v457, 1.0
      %v478 = vadd.f32 %v459, 1.0
      %v479 = vadd.f32 %v461, 1.0
      %v480 = vadd.f32 %v463, 1.0
      %v481 = vadd.f32 %v465, 1.0
      %v482 = vrcp.pop %v466
      %v483 = vmul.f32 %v466, %v482
      %v484 = vsub.f32 1.0, %v483
      %v485 = vmul.f32 %v482, %v484
      %v486 = vadd.f32 %v482, %v485
      %vm487 = vweird.f32 %v466
      %vm488 = vweird.f32 %v482
      %vm489 = vmor %vm487, %vm488
      %v490 = vsel %vm489, %v482, %v486
      %v491 = vand.u32 2147483647, %v466
      %vm492 = vcmp.eq.f32.partialorder %v491, 8.507059e+37
      %v493 = vand.u32 %v466, 2147483648
      %v494 = vor.u32 1.1754944e-38, %v493
      %v495 = vsel %vm492, %v494, %v490
      %v496 = vmul.f32 1.0, %v495
      %v497 = vrcp.pop %v467
      %v498 = vmul.f32 %v467, %v497
      %v499 = vsub.f32 1.0, %v498
      %v500 = vmul.f32 %v497, %v499
      %v501 = vadd.f32 %v497, %v500
      %vm502 = vweird.f32 %v467
      %vm503 = vweird.f32 %v497
      %vm504 = vmor %vm502, %vm503
      %v505 = vsel %vm504, %v497, %v501
      %v506 = vand.u32 2147483647, %v467
      %vm507 = vcmp.eq.f32.partialorder %v506, 8.507059e+37
      %v508 = vand.u32 %v467, 2147483648
      %v509 = vor.u32 1.1754944e-38, %v508
      %v510 = vsel %vm507, %v509, %v505
      %v511 = vmul.f32 1.0, %v510
      %v512 = vrcp.pop %v468
      %v513 = vmul.f32 %v468, %v512
      %v514 = vsub.f32 1.0, %v513
      %v515 = vmul.f32 %v512, %v514
      %v516 = vadd.f32 %v512, %v515
      %vm517 = vweird.f32 %v468
      %vm518 = vweird.f32 %v512
      %vm519 = vmor %vm517, %vm518
      %v520 = vsel %vm519, %v512, %v516
      %v521 = vand.u32 2147483647, %v468
      %vm522 = vcmp.eq.f32.partialorder %v521, 8.507059e+37
      %v523 = vand.u32 %v468, 2147483648
      %v524 = vor.u32 1.1754944e-38, %v523
      %v525 = vsel %vm522, %v524, %v520
      %v526 = vmul.f32 1.0, %v525
      %v527 = vrcp.pop %v469
      %v528 = vmul.f32 %v469, %v527
      %v529 = vsub.f32 1.0, %v528
      %v530 = vmul.f32 %v527, %v529
      %v531 = vadd.f32 %v527, %v530
      %vm532 = vweird.f32 %v469
      %vm533 = vweird.f32 %v527
      %vm534 = vmor %vm532, %vm533
      %v535 = vsel %vm534, %v527, %v531
      %v536 = vand.u32 2147483647, %v469
      %vm537 = vcmp.eq.f32.partialorder %v536, 8.507059e+37
      %v538 = vand.u32 %v469, 2147483648
      %v539 = vor.u32 1.1754944e-38, %v538
      %v540 = vsel %vm537, %v539, %v535
      %v541 = vmul.f32 1.0, %v540
      %v542 = vrcp.pop %v470
      %v543 = vmul.f32 %v470, %v542
      %v544 = vsub.f32 1.0, %v543
      %v545 = vmul.f32 %v542, %v544
      %v546 = vadd.f32 %v542, %v545
      %vm547 = vweird.f32 %v470
      %vm548 = vweird.f32 %v542
      %vm549 = vmor %vm547, %vm548
      %v550 = vsel %vm549, %v542, %v546
      %v551 = vand.u32 2147483647, %v470
      %vm552 = vcmp.eq.f32.partialorder %v551, 8.507059e+37
      %v553 = vand.u32 %v470, 2147483648
      %v554 = vor.u32 1.1754944e-38, %v553
      %v555 = vsel %vm552, %v554, %v550
      %v556 = vmul.f32 1.0, %v555
      %v557 = vrcp.pop %v471
      %v558 = vmul.f32 %v471, %v557
      %v559 = vsub.f32 1.0, %v558
      %v560 = vmul.f32 %v557, %v559
      %v561 = vadd.f32 %v557, %v560
      %vm562 = vweird.f32 %v471
      %vm563 = vweird.f32 %v557
      %vm564 = vmor %vm562, %vm563
      %v565 = vsel %vm564, %v557, %v561
      %v566 = vand.u32 2147483647, %v471
      %vm567 = vcmp.eq.f32.partialorder %v566, 8.507059e+37
      %v568 = vand.u32 %v471, 2147483648
      %v569 = vor.u32 1.1754944e-38, %v568
      %v570 = vsel %vm567, %v569, %v565
      %v571 = vmul.f32 1.0, %v570
      %v572 = vrcp.pop %v472
      %v573 = vmul.f32 %v472, %v572
      %v574 = vsub.f32 1.0, %v573
      %v575 = vmul.f32 %v572, %v574
      %v576 = vadd.f32 %v572, %v575
      %vm577 = vweird.f32 %v472
      %vm578 = vweird.f32 %v572
      %vm579 = vmor %vm577, %vm578
      %v580 = vsel %vm579, %v572, %v576
      %v581 = vand.u32 2147483647, %v472
      %vm582 = vcmp.eq.f32.partialorder %v581, 8.507059e+37
      %v583 = vand.u32 %v472, 2147483648
      %v584 = vor.u32 1.1754944e-38, %v583
      %v585 = vsel %vm582, %v584, %v580
      %v586 = vmul.f32 1.0, %v585
      %v587 = vrcp.pop %v473
      %v588 = vmul.f32 %v473, %v587
      %v589 = vsub.f32 1.0, %v588
      %v590 = vmul.f32 %v587, %v589
      %v591 = vadd.f32 %v587, %v590
      %vm592 = vweird.f32 %v473
      %vm593 = vweird.f32 %v587
      %vm594 = vmor %vm592, %vm593
      %v595 = vsel %vm594, %v587, %v591
      %v596 = vand.u32 2147483647, %v473
      %vm597 = vcmp.eq.f32.partialorder %v596, 8.507059e+37
      %v598 = vand.u32 %v473, 2147483648
      %v599 = vor.u32 1.1754944e-38, %v598
      %v600 = vsel %vm597, %v599, %v595
      %v601 = vmul.f32 1.0, %v600
      %v602 = vrcp.pop %v474
      %v603 = vmul.f32 %v474, %v602
      %v604 = vsub.f32 1.0, %v603
      %v605 = vmul.f32 %v602, %v604
      %v606 = vadd.f32 %v602, %v605
      %vm607 = vweird.f32 %v474
      %vm608 = vweird.f32 %v602
      %vm609 = vmor %vm607, %vm608
      %v610 = vsel %vm609, %v602, %v606
      %v611 = vand.u32 2147483647, %v474
      %vm612 = vcmp.eq.f32.partialorder %v611, 8.507059e+37
      %v613 = vand.u32 %v474, 2147483648
      %v614 = vor.u32 1.1754944e-38, %v613
      %v615 = vsel %vm612, %v614, %v610
      %v616 = vmul.f32 1.0, %v615
      %v617 = vrcp.pop %v475
      %v618 = vmul.f32 %v475, %v617
      %v619 = vsub.f32 1.0, %v618
      %v620 = vmul.f32 %v617, %v619
      %v621 = vadd.f32 %v617, %v620
      %vm622 = vweird.f32 %v475
      %vm623 = vweird.f32 %v617
      %vm624 = vmor %vm622, %vm623
      %v625 = vsel %vm624, %v617, %v621
      %v626 = vand.u32 2147483647, %v475
      %vm627 = vcmp.eq.f32.partialorder %v626, 8.507059e+37
      %v628 = vand.u32 %v475, 2147483648
      %v629 = vor.u32 1.1754944e-38, %v628
      %v630 = vsel %vm627, %v629, %v625
      %v631 = vmul.f32 1.0, %v630
      %v632 = vrcp.pop %v476
      %v633 = vmul.f32 %v476, %v632
      %v634 = vsub.f32 1.0, %v633
      %v635 = vmul.f32 %v632, %v634
      %v636 = vadd.f32 %v632, %v635
      %vm637 = vweird.f32 %v476
      %vm638 = vweird.f32 %v632
      %vm639 = vmor %vm637, %vm638
      %v640 = vsel %vm639, %v632, %v636
      %v641 = vand.u32 2147483647, %v476
      %vm642 = vcmp.eq.f32.partialorder %v641, 8.507059e+37
      %v643 = vand.u32 %v476, 2147483648
      %v644 = vor.u32 1.1754944e-38, %v643
      %v645 = vsel %vm642, %v644, %v640
      %v646 = vmul.f32 1.0, %v645
      %v647 = vrcp.pop %v477
      %v648 = vmul.f32 %v477, %v647
      %v649 = vsub.f32 1.0, %v648
      %v650 = vmul.f32 %v647, %v649
      %v651 = vadd.f32 %v647, %v650
      %vm652 = vweird.f32 %v477
      %vm653 = vweird.f32 %v647
      %vm654 = vmor %vm652, %vm653
      %v655 = vsel %vm654, %v647, %v651
      %v656 = vand.u32 2147483647, %v477
      %vm657 = vcmp.eq.f32.partialorder %v656, 8.507059e+37
      %v658 = vand.u32 %v477, 2147483648
      %v659 = vor.u32 1.1754944e-38, %v658
      %v660 = vsel %vm657, %v659, %v655
      %v661 = vmul.f32 1.0, %v660
      %v662 = vrcp.pop %v478
      %v663 = vmul.f32 %v478, %v662
      %v664 = vsub.f32 1.0, %v663
      %v665 = vmul.f32 %v662, %v664
      %v666 = vadd.f32 %v662, %v665
      %vm667 = vweird.f32 %v478
      %vm668 = vweird.f32 %v662
      %vm669 = vmor %vm667, %vm668
      %v670 = vsel %vm669, %v662, %v666
      %v671 = vand.u32 2147483647, %v478
      %vm672 = vcmp.eq.f32.partialorder %v671, 8.507059e+37
      %v673 = vand.u32 %v478, 2147483648
      %v674 = vor.u32 1.1754944e-38, %v673
      %v675 = vsel %vm672, %v674, %v670
      %v676 = vmul.f32 1.0, %v675
      %v677 = vrcp.pop %v479
      %v678 = vmul.f32 %v479, %v677
      %v679 = vsub.f32 1.0, %v678
      %v680 = vmul.f32 %v677, %v679
      %v681 = vadd.f32 %v677, %v680
      %vm682 = vweird.f32 %v479
      %vm683 = vweird.f32 %v677
      %vm684 = vmor %vm682, %vm683
      %v685 = vsel %vm684, %v677, %v681
      %v686 = vand.u32 2147483647, %v479
      %vm687 = vcmp.eq.f32.partialorder %v686, 8.507059e+37
      %v688 = vand.u32 %v479, 2147483648
      %v689 = vor.u32 1.1754944e-38, %v688
      %v690 = vsel %vm687, %v689, %v685
      %v691 = vmul.f32 1.0, %v690
      %v692 = vrcp.pop %v480
      %v693 = vmul.f32 %v480, %v692
      %v694 = vsub.f32 1.0, %v693
      %v695 = vmul.f32 %v692, %v694
      %v696 = vadd.f32 %v692, %v695
      %vm697 = vweird.f32 %v480
      %vm698 = vweird.f32 %v692
      %vm699 = vmor %vm697, %vm698
      %v700 = vsel %vm699, %v692, %v696
      %v701 = vand.u32 2147483647, %v480
      %vm702 = vcmp.eq.f32.partialorder %v701, 8.507059e+37
      %v703 = vand.u32 %v480, 2147483648
      %v704 = vor.u32 1.1754944e-38, %v703
      %v705 = vsel %vm702, %v704, %v700
      %v706 = vmul.f32 1.0, %v705
      %v707 = vrcp.pop %v481
      %v708 = vmul.f32 %v481, %v707
      %v709 = vsub.f32 1.0, %v708
      %v710 = vmul.f32 %v707, %v709
      %v711 = vadd.f32 %v707, %v710
      %vm712 = vweird.f32 %v481
      %vm713 = vweird.f32 %v707
      %vm714 = vmor %vm712, %vm713
      %v715 = vsel %vm714, %v707, %v711
      %v716 = vand.u32 2147483647, %v481
      %vm717 = vcmp.eq.f32.partialorder %v716, 8.507059e+37
      %v718 = vand.u32 %v481, 2147483648
      %v719 = vor.u32 1.1754944e-38, %v718
      %v720 = vsel %vm717, %v719, %v715
      %v721 = vmul.f32 1.0, %v720
      %v722 = vmul.f32 %v171, %v496
      %v723 = vmul.f32 %v172, %v496
      %v724 = vmul.f32 %v173, %v511
      %v725 = vmul.f32 %v174, %v511
      %v726 = vmul.f32 %v175, %v526
      %v727 = vmul.f32 %v176, %v526
      %v728 = vmul.f32 %v177, %v541
      %v729 = vmul.f32 %v178, %v541
      %v730 = vmul.f32 %v179, %v556
      %v731 = vmul.f32 %v180, %v556
      %v732 = vmul.f32 %v181, %v571
      %v733 = vmul.f32 %v182, %v571
      %v734 = vmul.f32 %v183, %v586
      %v735 = vmul.f32 %v184, %v586
      %v736 = vmul.f32 %v185, %v601
      %v737 = vmul.f32 %v186, %v601
      %v738 = vmul.f32 %v187, %v616
      %v739 = vmul.f32 %v188, %v616
      %v740 = vmul.f32 %v189, %v631
      %v741 = vmul.f32 %v190, %v631
      %v742 = vmul.f32 %v191, %v646
      %v743 = vmul.f32 %v192, %v646
      %v744 = vmul.f32 %v193, %v661
      %v745 = vmul.f32 %v194, %v661
      %v746 = vmul.f32 %v195, %v676
      %v747 = vmul.f32 %v196, %v676
      %v748 = vmul.f32 %v197, %v691
      %v749 = vmul.f32 %v198, %v691
      %v750 = vmul.f32 %v199, %v706
      %v751 = vmul.f32 %v200, %v706
      %v752 = vmul.f32 %v201, %v721
      %v753 = vmul.f32 %v202, %v721
      %754 = vst [vmem:[%s170] sm:$0xff] %v722
      %755 = vst [vmem:[%s170 + $0x8] sm:$0xff] %v723
      %756 = vst [vmem:[%s170 + $0x10] sm:$0xff] %v724
      %757 = vst [vmem:[%s170 + $0x18] sm:$0xff] %v725
      %758 = vst [vmem:[%s170 + $0x20] sm:$0xff] %v726
      %759 = vst [vmem:[%s170 + $0x28] sm:$0xff] %v727
      %760 = vst [vmem:[%s170 + $0x30] sm:$0xff] %v728
      %761 = vst [vmem:[%s170 + $0x38] sm:$0xff] %v729
      %762 = vst [vmem:[%s170 + $0x40] sm:$0xff] %v730
      %763 = vst [vmem:[%s170 + $0x48] sm:$0xff] %v731
      %764 = vst [vmem:[%s170 + $0x50] sm:$0xff] %v732
      %765 = vst [vmem:[%s170 + $0x58] sm:$0xff] %v733
      %766 = vst [vmem:[%s170 + $0x60] sm:$0xff] %v734
      %767 = vst [vmem:[%s170 + $0x68] sm:$0xff] %v735
      %768 = vst [vmem:[%s170 + $0x70] sm:$0xff] %v736
      %769 = vst [vmem:[%s170 + $0x78] sm:$0xff] %v737
      %770 = vst [vmem:[%s170 + $0x80] sm:$0xff] %v738
      %771 = vst [vmem:[%s170 + $0x88] sm:$0xff] %v739
      %772 = vst [vmem:[%s170 + $0x90] sm:$0xff] %v740
      %773 = vst [vmem:[%s170 + $0x98] sm:$0xff] %v741
      %774 = vst [vmem:[%s170 + $0xa0] sm:$0xff] %v742
      %775 = vst [vmem:[%s170 + $0xa8] sm:$0xff] %v743
      %776 = vst [vmem:[%s170 + $0xb0] sm:$0xff] %v744
      %777 = vst [vmem:[%s170 + $0xb8] sm:$0xff] %v745
      %778 = vst [vmem:[%s170 + $0xc0] sm:$0xff] %v746
      %779 = vst [vmem:[%s170 + $0xc8] sm:$0xff] %v747
      %780 = vst [vmem:[%s170 + $0xd0] sm:$0xff] %v748
      %781 = vst [vmem:[%s170 + $0xd8] sm:$0xff] %v749
      %782 = vst [vmem:[%s170 + $0xe0] sm:$0xff] %v750
      %783 = vst [vmem:[%s170 + $0xe8] sm:$0xff] %v751
      %784 = vst [vmem:[%s170 + $0xf0] sm:$0xff] %v752
      %785 = vst [vmem:[%s170 + $0xf8] sm:$0xff] %v753
      %p786 = scmp.lt.s32.totalorder %s14, 1
      %s787 = scalar_select %p786, %s14, 1
      %s788 = smul.addr %s787, 32
      %s789 = smul.addr %s788, 8
      %s790 = scalar_lea.vmem %s3, %s789
      // Predicated region
      $region33: #{se_layer_forward.1} parent=31 // pred_check
        %p791 = pneg %p100
      $region34: #{se_layer_forward.1} parent=31 // pred_check_branch
        %793 = sbr.rel (%p791) target = $region36
      $region35: #{se_layer_forward.1} parent=31 // pred_region
        _
      $region36: #{se_layer_forward.1} parent=31 // pred_fallthru
        _
    $region32: #{se_layer_forward.1} parent=5 // pred_fallthru
      _
    %p794 = scmp.le.s32.totalorder 2, %s9
    // Predicated region
    $region37: #{se_layer_forward.1} parent=5 // pred_check
      %p795 = pneg %p794
    $region38: #{se_layer_forward.1} parent=5 // pred_check_branch
      %797 = sbr.rel (%p795) target = $region40
    $region39: #{se_layer_forward.1} parent=5 // pred_region
      %s798 = ssub.s32 %s9, 2
      // Predicated region
      $region41: #{se_layer_forward.1} parent=39 // pred_check
        %p799 = pneg %p106
      $region42: #{se_layer_forward.1} parent=39 // pred_check_branch
        %801 = sbr.rel (%p799) target = $region44
      $region43: #{se_layer_forward.1} parent=39 // pred_region
        %p802 = scmp.lt.s32.totalorder %s15, 1
        %s803 = scalar_select %p802, %s15, 1
        %s804 = smul.addr %s803, 32
        %s805 = smul.addr %s804, 8
        %s806 = scalar_lea.vmem %s3, %s805
      $region44: #{se_layer_forward.1} parent=39 // pred_fallthru
        _
    $region40: #{se_layer_forward.1} parent=5 // pred_fallthru
      _
  $region6: #{se_layer_forward.1} parent=0 // loop_footer
    %s13 = sadd.s32 1, %s9
  $region7: #{se_layer_forward.1} parent=0 // loop_footer_branch
    %8 = sbr.rel target = $region3
  $region8: #{se_layer_forward.1} parent=0 // loop_exit
    _

</llo_original>
